<compile_context>
chip_gen: v7x
topology: tpu7x:2x2x1
jax: 0.10.0
libtpu: 0.0.40
codegen_flags: <defaults>
</compile_context>

<pallas_src>
import functools

import numpy as np
import jax
import jax.numpy as jnp
from jax import lax
from jax.experimental import pallas as pl
from jax.experimental.pallas import tpu as pltpu


def _round_up(v, m):
    return (v + m - 1) // m * m


def _cdiv(a, b):
    return (a + b - 1) // b


def _proxy_classify_kernel(x_ref, wb_ref, bb_ref, w2_ref, b2_ref, y_ref,
                           out_ref, scal_ref, *, batch, tb, n_pad):
    # ---- backbone stand-in: feat = x @ Wb + bb  (bf16 inputs, f32 accumulation) ----
    feat = jnp.dot(x_ref[...], wb_ref[...],
                   preferred_element_type=jnp.float32) + bb_ref[...]          # [tb, Dp] f32

    # rows of this block that are real (partial last block -> unspecified pad rows, mask them)
    row_ids = lax.broadcasted_iota(jnp.int32, (tb, 1), 0) + pl.program_id(0) * tb
    row_mask = row_ids < batch                                                # [tb, 1] bool

    # ---- reg_e partial: sum_i ||feat_i||_2 over real rows of this block ----
    f_sq = jnp.sum(feat * feat, axis=1, keepdims=True)                        # [tb, 1]
    reg_part = jnp.sum(jnp.where(row_mask, jnp.sqrt(f_sq), 0.0),
                       axis=0, keepdims=True)                                 # [1, 1]

    # ---- single fused 256-lane matmul: [heads | 2*proxies^T], bias = [bcat | -p_sq/-1e30] ----
    res = jnp.dot(feat.astype(w2_ref.dtype), w2_ref[...],
                  preferred_element_type=jnp.float32) + b2_ref[...]           # [tb, Npad+Cpad]

    # split: multi-task head outputs (lane-dense slab, sliced per-task in the wrapper)
    out_ref[...] = res[:, :n_pad].astype(out_ref.dtype)                       # [tb, Npad]

    # proxy logits: res_proxy = 2*feat.p - p_sq  ->  logits = -||feat - p||^2 = res_proxy - f_sq
    # pad proxy lanes carry bias -1e30 so they never win the max / contribute to the sum.
    logits = res[:, n_pad:] - f_sq                                            # [tb, Cpad]
    m = jnp.max(logits, axis=1, keepdims=True)
    lse = m + jnp.log(jnp.sum(jnp.exp(logits - m), axis=1, keepdims=True))    # [tb, 1]

    # target logit via int label select (no one-hot input)
    col_ids = lax.broadcasted_iota(jnp.int32, logits.shape, 1)
    tgt = jnp.sum(jnp.where(col_ids == y_ref[...], logits, 0.0),
                  axis=1, keepdims=True)                                      # [tb, 1]
    per_row = lse - tgt
    loss_part = jnp.sum(jnp.where(row_mask, per_row, 0.0),
                        axis=0, keepdims=True)                                # [1, 1]

    # ---- lane-dense per-block scalar slab: lane 0 = loss partial, lane 1 = reg partial ----
    lane_ids = lax.broadcasted_iota(jnp.int32, (1, 128), 1)
    scal_ref[...] = (jnp.where(lane_ids == 0, loss_part, 0.0)
                     + jnp.where(lane_ids == 1, reg_part, 0.0))


def _vmem_limit_bytes(tb, n_input, dp, nc_pad, n_pad):
    # double-buffered per-block tiles + resident weights, with headroom
    per_block = tb * n_input * 2 + tb * 4 + tb * n_pad * 4 + 128 * 4
    weights = n_input * dp * 2 + dp * 4 + dp * nc_pad * 2 + nc_pad * 4
    total = 2 * (per_block + weights) + (4 << 20)
    return int(min(max(total, 16 << 20), 64 << 20))


def proxy_classify_forward(x_bf16, wb_p, bb_p, w2, b2, y2d, *, batch, tb, n_pad, nc_pad):
    """One fused pallas_call over a batch grid.

    Returns (out_cat [B, N_pad] f32, scal [grid, 128] f32 per-block partials)."""
    n_input = x_bf16.shape[1]
    dp = wb_p.shape[1]
    grid = _cdiv(batch, tb)
    kernel = functools.partial(_proxy_classify_kernel, batch=batch, tb=tb, n_pad=n_pad)
    return pl.pallas_call(
        kernel,
        out_shape=(
            jax.ShapeDtypeStruct((batch, n_pad), jnp.float32),
            jax.ShapeDtypeStruct((grid, 128), jnp.float32),
        ),
        grid_spec=pltpu.PrefetchScalarGridSpec(
            num_scalar_prefetch=0,
            grid=(grid,),
            in_specs=[
                pl.BlockSpec((tb, n_input), lambda i: (i, 0)),    # x rows
                pl.BlockSpec((n_input, dp), lambda i: (0, 0)),    # backbone W   (resident)
                pl.BlockSpec((1, dp), lambda i: (0, 0)),          # backbone b   (resident)
                pl.BlockSpec((dp, nc_pad), lambda i: (0, 0)),     # fused W      (resident)
                pl.BlockSpec((1, nc_pad), lambda i: (0, 0)),      # fused bias   (resident)
                pl.BlockSpec((tb, 1), lambda i: (i, 0)),          # int32 labels
            ],
            out_specs=(
                pl.BlockSpec((tb, n_pad), lambda i: (i, 0)),      # head outputs
                pl.BlockSpec((1, 128), lambda i: (i, 0)),         # loss/reg partials
            ),
        ),
        compiler_params=pltpu.CompilerParams(
            dimension_semantics=("parallel",),
            vmem_limit_bytes=_vmem_limit_bytes(tb, n_input, dp, nc_pad, n_pad)),
    )(x_bf16, wb_p, bb_p, w2, b2, y2d)


class ProxyClassifyNetPallas:
    """JAX/Pallas equivalent of the PyTorch ProxyClassifyNet forward pass.

    backbone -> Linear(n_input, feat_dim) stand-in (fused in-kernel)
    multi    -> [Linear(feat_dim, t) for t in tasks], concatenated & lane-padded
    proxies  -> Embedding(n_classes, feat_dim).weight; loss = CE(-squared_dist, y)
    """

    def __init__(self, n_input, feat_dim, tasks, n_classes, key):
        # TODO(synk): the original backbone is an arbitrary user-supplied nn.Module
        # (optionally wrapped in nn.DataParallel); a single Linear stand-in is used here.
        self.n_input = n_input
        self.feat_dim = feat_dim
        self.tasks = tuple(tasks)
        self.n_classes = n_classes

        key, kwb, kbb, kp = jax.random.split(key, 4)
        bound_in = 1.0 / (n_input ** 0.5)            # PyTorch Linear default uniform init
        self.wb = jax.random.uniform(kwb, (n_input, feat_dim), jnp.float32, -bound_in, bound_in)
        self.bb = jax.random.uniform(kbb, (feat_dim,), jnp.float32, -bound_in, bound_in)

        bound_f = 1.0 / (feat_dim ** 0.5)
        self.head_params = []
        for t in self.tasks:
            key, kw, kb = jax.random.split(key, 3)
            w = jax.random.uniform(kw, (feat_dim, t), jnp.float32, -bound_f, bound_f)
            b = jax.random.uniform(kb, (t,), jnp.float32, -bound_f, bound_f)
            self.head_params.append((w, b))

        # proxies ~ nn.Embedding(n_classes, feat_dim).weight (N(0,1) init)
        self.proxies = jax.random.normal(kp, (n_classes, feat_dim), jnp.float32)

        # ---------------- kernel-side fused / padded / bf16 parameters ----------------
        n_total = sum(self.tasks)
        self.n_pad = _round_up(max(n_total, 1), 128)          # head lanes
        self.c_pad = _round_up(max(n_classes, 1), 128)        # proxy lanes
        self.nc_pad = self.n_pad + self.c_pad                 # single 256-lane MXU pass
        self.dp = _round_up(feat_dim, 128)                    # lane-dense feat (K=128)

        # backbone weights: pad feat_dim to 128 lanes, bf16 storage, f32 bias
        wb_p = jnp.zeros((n_input, self.dp), jnp.float32).at[:, :feat_dim].set(self.wb)
        self.wb_p = wb_p.astype(jnp.bfloat16)
        self.bb_p = jnp.zeros((1, self.dp), jnp.float32).at[0, :feat_dim].set(self.bb)

        # fused second-stage weight: [ head weights | 2 * proxies^T ], bf16
        wcat = jnp.concatenate([w for (w, _) in self.head_params], axis=1)     # [D, n_total]
        bcat = jnp.concatenate([b for (_, b) in self.head_params], axis=0)     # [n_total]
        proxies_q = self.proxies.astype(jnp.bfloat16).astype(jnp.float32)      # bf16-quantized
        p_sq = jnp.sum(proxies_q * proxies_q, axis=1)                          # [C] f32 (at init)

        w2 = jnp.zeros((self.dp, self.nc_pad), jnp.float32)
        w2 = w2.at[:feat_dim, :n_total].set(wcat)
        w2 = w2.at[:feat_dim, self.n_pad:self.n_pad + n_classes].set(2.0 * proxies_q.T)
        self.w2 = w2.astype(jnp.bfloat16)

        # fused bias: [ bcat | -p_sq ], pad proxy lanes = -1e30 (free softmax mask)
        b2 = jnp.zeros((1, self.nc_pad), jnp.float32)
        b2 = b2.at[0, :n_total].set(bcat)
        b2 = b2.at[0, self.n_pad:].set(-1e30)
        b2 = b2.at[0, self.n_pad:self.n_pad + n_classes].set(-p_sq)
        self.b2 = b2

        self._offsets = np.cumsum([0] + list(self.tasks))

    def _run(self, x, y):
        batch = x.shape[0]
        tb = min(256, _round_up(max(batch, 1), 8))            # row block (8 at toy sizes)
        x_bf16 = x.astype(jnp.bfloat16)
        y2d = y.astype(jnp.int32).reshape(batch, 1)
        out_cat, scal = proxy_classify_forward(
            x_bf16, self.wb_p, self.bb_p, self.w2, self.b2, y2d,
            batch=batch, tb=tb, n_pad=self.n_pad, nc_pad=self.nc_pad)
        inv_b = 1.0 / float(batch)
        loss = jnp.sum(scal[:, 0]) * inv_b                    # reduce per-block partials
        reg_e = jnp.sum(scal[:, 1]) * inv_b
        outs = [out_cat[:, self._offsets[i]:self._offsets[i + 1]]
                for i in range(len(self.tasks))]
        return outs, loss, reg_e

    def __call__(self, x, y=None, get_proxies=True):
        if get_proxies:
            outs, loss, reg_e = self._run(x, y)
            return outs, loss, reg_e
        dummy_y = jnp.zeros((x.shape[0],), jnp.int32)
        outs, _, reg_e = self._run(x, dummy_y)
        return outs, reg_e

    def classify(self, x):
        dummy_y = jnp.zeros((x.shape[0],), jnp.int32)
        outs, _, _ = self._run(x, dummy_y)
        return outs


def reference_forward(model, x, y):
    # Pure-JAX reference mirroring the PyTorch forward with the same bf16 weight
    # quantization / f32 accumulation the kernel uses.
    xb = x.astype(jnp.bfloat16)
    wbq = model.wb.astype(jnp.bfloat16)
    feat = jnp.dot(xb, wbq, preferred_element_type=jnp.float32) + model.bb
    reg_e = jnp.mean(jnp.sqrt(jnp.sum(feat * feat, axis=1)))
    featb = feat.astype(jnp.bfloat16)
    outs = [jnp.dot(featb, w.astype(jnp.bfloat16), preferred_element_type=jnp.float32) + b
            for (w, b) in model.head_params]
    pq = model.proxies.astype(jnp.bfloat16).astype(jnp.float32)
    f_sq = jnp.sum(feat * feat, axis=1, keepdims=True)
    p_sq = jnp.sum(pq * pq, axis=1)[None, :]
    cross = jnp.dot(featb, pq.astype(jnp.bfloat16).T, preferred_element_type=jnp.float32)
    den = f_sq + p_sq - 2.0 * cross
    logits = -den
    lse = jax.scipy.special.logsumexp(logits, axis=1)
    tgt = logits[jnp.arange(x.shape[0]), y]
    loss = jnp.mean(lse - tgt)
    return outs, loss, reg_e


if __name__ == "__main__":
    key = jax.random.PRNGKey(0)
    key, kx, ky, kparams = jax.random.split(key, 4)

    batch, n_input, feat_dim = 2, 64, 32
    tasks = (8, 16, 4)
    n_classes = 10

    x = jax.random.normal(kx, (batch, n_input), dtype=jnp.float32)
    y = jax.random.randint(ky, (batch,), 0, n_classes, dtype=jnp.int32)

    model = ProxyClassifyNetPallas(n_input, feat_dim, tasks, n_classes, kparams)

    outs, loss, reg_e = model(x, y, get_proxies=True)
    outs = [jax.block_until_ready(o) for o in outs]
    loss = jax.block_until_ready(loss)
    reg_e = jax.block_until_ready(reg_e)

    ref_outs, ref_loss, ref_reg = reference_forward(model, x, y)
    for o, r, t in zip(outs, ref_outs, tasks):
        assert o.shape == (batch, t), (o.shape, (batch, t))
        assert jnp.allclose(o, r, atol=2e-3, rtol=2e-3), "multi-head output mismatch"
    assert jnp.allclose(loss, ref_loss, atol=2e-3, rtol=2e-3), (float(loss), float(ref_loss))
    assert jnp.allclose(reg_e, ref_reg, atol=2e-3, rtol=2e-3), (float(reg_e), float(ref_reg))

    # get_proxies=False path / classify() exercise the same fused kernel.
    outs2, reg2 = model(x, get_proxies=False)
    _ = [jax.block_until_ready(o) for o in outs2]
    _ = jax.block_until_ready(reg2)
    outs3 = model.classify(x)
    _ = [jax.block_until_ready(o) for o in outs3]

    print("KERNEL_OK")
</pallas_src>

<mosaic_0001>
module attributes {stable_mosaic.version = 11 : i64} {
  func.func @_proxy_classify_kernel(%arg0: i32, %arg1: memref<8x64xbf16, #tpu.memory_space<vmem>>, %arg2: memref<64x128xbf16, #tpu.memory_space<vmem>>, %arg3: memref<1x128xf32, #tpu.memory_space<vmem>>, %arg4: memref<128x256xbf16, #tpu.memory_space<vmem>>, %arg5: memref<1x256xf32, #tpu.memory_space<vmem>>, %arg6: memref<8x1xi32, #tpu.memory_space<vmem>>, %arg7: memref<8x128xf32, #tpu.memory_space<vmem>>, %arg8: memref<1x128xf32, #tpu.memory_space<vmem>>) attributes {dimension_semantics = [#tpu.dimension_semantics<parallel>], iteration_bounds = array<i64: 1>, scalar_prefetch = 0 : i64, scratch_operands = 0 : i64, tpu.core_type = #tpu.core_type<tc>, window_params = [{transform_indices = @transform_0, window_bounds = array<i64: 8, 64>}, {pipeline_mode = #tpu.pipeline_mode<synchronous>, transform_indices = @transform_1, window_bounds = array<i64: 64, 128>}, {pipeline_mode = #tpu.pipeline_mode<synchronous>, transform_indices = @transform_2, window_bounds = array<i64: 1, 128>}, {pipeline_mode = #tpu.pipeline_mode<synchronous>, transform_indices = @transform_3, window_bounds = array<i64: 128, 256>}, {pipeline_mode = #tpu.pipeline_mode<synchronous>, transform_indices = @transform_4, window_bounds = array<i64: 1, 256>}, {transform_indices = @transform_5, window_bounds = array<i64: 8, 1>}, {transform_indices = @transform_6, window_bounds = array<i64: 8, 128>}, {transform_indices = @transform_7, window_bounds = array<i64: 1, 128>}]} {
    %c0 = arith.constant 0 : index
    %c0_0 = arith.constant 0 : index
    %0 = vector.load %arg1[%c0, %c0_0] : memref<8x64xbf16, #tpu.memory_space<vmem>>, vector<8x64xbf16>
    %c0_1 = arith.constant 0 : index
    %c0_2 = arith.constant 0 : index
    %1 = vector.load %arg2[%c0_1, %c0_2] : memref<64x128xbf16, #tpu.memory_space<vmem>>, vector<64x128xbf16>
    %cst = arith.constant dense<0.000000e+00> : vector<8x128xf32>
    %2 = tpu.matmul %0, %1, %cst {dimension_numbers = #tpu.dot_dimension_numbers<[1], [0], [0], [1], [0, 0, 1, 1], [], []>} : vector<8x64xbf16>, vector<64x128xbf16>, vector<8x128xf32> -> vector<8x128xf32>
    %c0_3 = arith.constant 0 : index
    %c0_4 = arith.constant 0 : index
    %3 = vector.load %arg3[%c0_3, %c0_4] : memref<1x128xf32, #tpu.memory_space<vmem>>, vector<1x128xf32>
    %4 = vector.broadcast %3 : vector<1x128xf32> to vector<8x128xf32>
    %5 = arith.addf %2, %4 : vector<8x128xf32>
    %6 = tpu.iota {dimensions = array<i32: 0>} : vector<8x1xi32>
    %c8_i32 = arith.constant 8 : i32
    %7 = arith.muli %arg0, %c8_i32 : i32
    %8 = vector.broadcast %7 : i32 to vector<8x1xi32>
    %9 = arith.addi %6, %8 : vector<8x1xi32>
    %c2_i32 = arith.constant 2 : i32
    %10 = vector.broadcast %c2_i32 : i32 to vector<8x1xi32>
    %11 = arith.cmpi slt, %9, %10 : vector<8x1xi32>
    %12 = arith.mulf %5, %5 : vector<8x128xf32>
    %cst_5 = arith.constant dense<0.000000e+00> : vector<8xf32>
    %13 = vector.multi_reduction <add>, %12, %cst_5 [1] : vector<8x128xf32> to vector<8xf32>
    %14 = vector.shape_cast %13 : vector<8xf32> to vector<8x1xf32>
    %15 = math.sqrt %14 : vector<8x1xf32>
    %cst_6 = arith.constant 0.000000e+00 : f32
    %16 = vector.broadcast %cst_6 : f32 to vector<8x1xf32>
    %17 = arith.select %11, %15, %16 : vector<8x1xi1>, vector<8x1xf32>
    %cst_7 = arith.constant dense<0.000000e+00> : vector<1xf32>
    %18 = vector.multi_reduction <add>, %17, %cst_7 [0] : vector<8x1xf32> to vector<1xf32>
    %19 = vector.shape_cast %18 : vector<1xf32> to vector<1x1xf32>
    %20 = arith.truncf %5 : vector<8x128xf32> to vector<8x128xbf16>
    %c0_8 = arith.constant 0 : index
    %c0_9 = arith.constant 0 : index
    %21 = vector.load %arg4[%c0_8, %c0_9] : memref<128x256xbf16, #tpu.memory_space<vmem>>, vector<128x256xbf16>
    %cst_10 = arith.constant dense<0.000000e+00> : vector<8x256xf32>
    %22 = tpu.matmul %20, %21, %cst_10 {dimension_numbers = #tpu.dot_dimension_numbers<[1], [0], [0], [1], [0, 0, 1, 1], [], []>} : vector<8x128xbf16>, vector<128x256xbf16>, vector<8x256xf32> -> vector<8x256xf32>
    %c0_11 = arith.constant 0 : index
    %c0_12 = arith.constant 0 : index
    %23 = vector.load %arg5[%c0_11, %c0_12] : memref<1x256xf32, #tpu.memory_space<vmem>>, vector<1x256xf32>
    %24 = vector.broadcast %23 : vector<1x256xf32> to vector<8x256xf32>
    %25 = arith.addf %22, %24 : vector<8x256xf32>
    %26 = vector.extract_strided_slice %25 {offsets = [0, 0], sizes = [8, 128], strides = [1, 1]} : vector<8x256xf32> to vector<8x128xf32>
    %c0_13 = arith.constant 0 : index
    %c0_14 = arith.constant 0 : index
    %27 = vector.load %arg7[%c0_13, %c0_14] : memref<8x128xf32, #tpu.memory_space<vmem>>, vector<8x128xf32>
    tpu.vector_store %arg7[%c0_13, %c0_14], %26 {strides = array<i32>} : memref<8x128xf32, #tpu.memory_space<vmem>>, vector<8x128xf32>,
    %28 = vector.extract_strided_slice %25 {offsets = [0, 128], sizes = [8, 128], strides = [1, 1]} : vector<8x256xf32> to vector<8x128xf32>
    %29 = vector.broadcast %14 : vector<8x1xf32> to vector<8x128xf32>
    %30 = arith.subf %28, %29 : vector<8x128xf32>
    %cst_15 = arith.constant dense<0xFF800000> : vector<8xf32>
    %31 = vector.multi_reduction <maximumf>, %30, %cst_15 [1] : vector<8x128xf32> to vector<8xf32>
    %32 = vector.shape_cast %31 : vector<8xf32> to vector<8x1xf32>
    %33 = vector.broadcast %32 : vector<8x1xf32> to vector<8x128xf32>
    %34 = arith.subf %30, %33 : vector<8x128xf32>
    %35 = math.exp %34 : vector<8x128xf32>
    %cst_16 = arith.constant dense<0.000000e+00> : vector<8xf32>
    %36 = vector.multi_reduction <add>, %35, %cst_16 [1] : vector<8x128xf32> to vector<8xf32>
    %37 = vector.shape_cast %36 : vector<8xf32> to vector<8x1xf32>
    %38 = math.log %37 : vector<8x1xf32>
    %39 = arith.addf %32, %38 : vector<8x1xf32>
    %40 = tpu.iota {dimensions = array<i32: 1>} : vector<8x128xi32>
    %c0_17 = arith.constant 0 : index
    %c0_18 = arith.constant 0 : index
    %41 = vector.load %arg6[%c0_17, %c0_18] : memref<8x1xi32, #tpu.memory_space<vmem>>, vector<8x1xi32>
    %42 = vector.broadcast %41 : vector<8x1xi32> to vector<8x128xi32>
    %43 = arith.cmpi eq, %40, %42 : vector<8x128xi32>
    %cst_19 = arith.constant 0.000000e+00 : f32
    %44 = vector.broadcast %cst_19 : f32 to vector<8x128xf32>
    %45 = arith.select %43, %30, %44 : vector<8x128xi1>, vector<8x128xf32>
    %cst_20 = arith.constant dense<0.000000e+00> : vector<8xf32>
    %46 = vector.multi_reduction <add>, %45, %cst_20 [1] : vector<8x128xf32> to vector<8xf32>
    %47 = vector.shape_cast %46 : vector<8xf32> to vector<8x1xf32>
    %48 = arith.subf %39, %47 : vector<8x1xf32>
    %cst_21 = arith.constant 0.000000e+00 : f32
    %49 = vector.broadcast %cst_21 : f32 to vector<8x1xf32>
    %50 = arith.select %11, %48, %49 : vector<8x1xi1>, vector<8x1xf32>
    %cst_22 = arith.constant dense<0.000000e+00> : vector<1xf32>
    %51 = vector.multi_reduction <add>, %50, %cst_22 [0] : vector<8x1xf32> to vector<1xf32>
    %52 = vector.shape_cast %51 : vector<1xf32> to vector<1x1xf32>
    %53 = tpu.iota {dimensions = array<i32: 1>} : vector<1x128xi32>
    %c0_i32 = arith.constant 0 : i32
    %54 = vector.broadcast %c0_i32 : i32 to vector<1x128xi32>
    %55 = arith.cmpi eq, %53, %54 : vector<1x128xi32>
    %cst_23 = arith.constant 0.000000e+00 : f32
    %56 = vector.shape_cast %52 : vector<1x1xf32> to vector<1x1xf32>
    %57 = vector.broadcast %56 : vector<1x1xf32> to vector<1x128xf32>
    %58 = vector.broadcast %cst_23 : f32 to vector<1x128xf32>
    %59 = arith.select %55, %57, %58 : vector<1x128xi1>, vector<1x128xf32>
    %c1_i32 = arith.constant 1 : i32
    %60 = vector.broadcast %c1_i32 : i32 to vector<1x128xi32>
    %61 = arith.cmpi eq, %53, %60 : vector<1x128xi32>
    %cst_24 = arith.constant 0.000000e+00 : f32
    %62 = vector.shape_cast %19 : vector<1x1xf32> to vector<1x1xf32>
    %63 = vector.broadcast %62 : vector<1x1xf32> to vector<1x128xf32>
    %64 = vector.broadcast %cst_24 : f32 to vector<1x128xf32>
    %65 = arith.select %61, %63, %64 : vector<1x128xi1>, vector<1x128xf32>
    %66 = arith.addf %59, %65 : vector<1x128xf32>
    %c0_25 = arith.constant 0 : index
    %c0_26 = arith.constant 0 : index
    %67 = vector.load %arg8[%c0_25, %c0_26] : memref<1x128xf32, #tpu.memory_space<vmem>>, vector<1x128xf32>
    tpu.vector_store %arg8[%c0_25, %c0_26], %66 {strides = array<i32>} : memref<1x128xf32, #tpu.memory_space<vmem>>, vector<1x128xf32>,
    return
  }
  func.func @transform_0(%arg0: i32) -> (i32, i32) {
    %c0_i32 = arith.constant 0 : i32
    %c0_i32_0 = arith.constant 0 : i32
    return %arg0, %c0_i32 : i32, i32
  }
  func.func @transform_1(%arg0: i32) -> (i32, i32) {
    %c0_i32 = arith.constant 0 : i32
    %c0_i32_0 = arith.constant 0 : i32
    %c0_i32_1 = arith.constant 0 : i32
    return %c0_i32, %c0_i32_0 : i32, i32
  }
  func.func @transform_2(%arg0: i32) -> (i32, i32) {
    %c0_i32 = arith.constant 0 : i32
    %c0_i32_0 = arith.constant 0 : i32
    %c0_i32_1 = arith.constant 0 : i32
    return %c0_i32, %c0_i32_0 : i32, i32
  }
  func.func @transform_3(%arg0: i32) -> (i32, i32) {
    %c0_i32 = arith.constant 0 : i32
    %c0_i32_0 = arith.constant 0 : i32
    %c0_i32_1 = arith.constant 0 : i32
    return %c0_i32, %c0_i32_0 : i32, i32
  }
  func.func @transform_4(%arg0: i32) -> (i32, i32) {
    %c0_i32 = arith.constant 0 : i32
    %c0_i32_0 = arith.constant 0 : i32
    %c0_i32_1 = arith.constant 0 : i32
    return %c0_i32, %c0_i32_0 : i32, i32
  }
  func.func @transform_5(%arg0: i32) -> (i32, i32) {
    %c0_i32 = arith.constant 0 : i32
    %c0_i32_0 = arith.constant 0 : i32
    return %arg0, %c0_i32 : i32, i32
  }
  func.func @transform_6(%arg0: i32) -> (i32, i32) {
    %c0_i32 = arith.constant 0 : i32
    %c0_i32_0 = arith.constant 0 : i32
    return %arg0, %c0_i32 : i32, i32
  }
  func.func @transform_7(%arg0: i32) -> (i32, i32) {
    %c0_i32 = arith.constant 0 : i32
    %c0_i32_0 = arith.constant 0 : i32
    return %arg0, %c0_i32 : i32, i32
  }
}

</mosaic_0001>

<llo_original>
// kernel: tpu_custom_call.1
$region0: #{tpu_custom_call.1}
  #allocation0 [shape = 'u32[]', space=smem, size = 0x4, offset = 0x4, fixed_abs, tag = 'smem constant byte address 0x4 - core index']
  #allocation1 [shape = 'u32[144,128]{1,0:T(1,128)}', space=vmem, size = 0x12000, scoped, tag = 'internal scratch']
  %s0 = inlined_call_operand.vmem [shape: bf16[2,64], index: 0, kind: input, shape index: {}]
  %s1 = inlined_call_operand.hbm [shape: bf16[64,128], index: 1, kind: input, shape index: {}]
  %s2 = inlined_call_operand.vmem [shape: f32[1,128], index: 2, kind: input, shape index: {}]
  %s3 = inlined_call_operand.hbm [shape: bf16[128,256], index: 3, kind: input, shape index: {}]
  %s4 = inlined_call_operand.vmem [shape: f32[1,256], index: 4, kind: input, shape index: {}]
  %s5 = inlined_call_operand.vmem [shape: s32[2,1], index: 5, kind: input, shape index: {}]
  %s6 = inlined_call_operand.hbm [shape: f32[2,128], index: 6, kind: output, shape index: {0}]
  %s7 = inlined_call_operand.hbm [shape: f32[1,128], index: 7, kind: output, shape index: {1}]
  %8 = xla_tuple %s6, %s7
  %s9 = sld [smem:[#allocation0]]
  $region50: #{tpu_custom_call.1} parent=0
    _
  %s11 = ssub.s32 1, %s9
  %s12 = scalar_select 0, %s11, %s9
  $region1: #{tpu_custom_call.1} parent=0
    #allocation2 [shape = 'u8[16384]{0}', space=vmem, size = 0x4000, scoped, tag = 'input window, operand 1, single buffered']
    #allocation3 [shape = 's32[1]{0}', space=sflag, size = 0x4, scoped, tag = 'scoped memory for tpu_custom_call.1']
    #allocation4 [shape = 's32[1]{0}', space=sflag, size = 0x4, scoped, tag = 'scoped memory for tpu_custom_call.1']
    #allocation5 [shape = 'u8[65536]{0}', space=vmem, size = 0x10000, scoped, tag = 'input window, operand 3, single buffered']
    #allocation6 [shape = 's32[1]{0}', space=sflag, size = 0x4, scoped, tag = 'scoped memory for tpu_custom_call.1']
    #allocation7 [shape = 'u8[4096]{0}', space=vmem, size = 0x1000, scoped, tag = 'output window, operand 0, single buffered']
    #allocation8 [shape = 'u8[512]{0}', space=vmem, size = 0x400, scoped, tag = 'output window, operand 1, single buffered']
    #allocation9 [shape = 's32[1]{0}', space=sflag, size = 0x4, scoped, tag = 'scoped memory for tpu_custom_call.1']
    %13 = vsyncpa [#allocation3], 0
    %14 = vsyncpa [#allocation6], 0
    %15 = vsyncpa [#allocation4], 0
    %16 = vsyncpa [#allocation9], 0
    // Predicated region
    $region2: #{tpu_custom_call.1} parent=1 // pred_check
      _
    $region3: #{tpu_custom_call.1} parent=1 // pred_check_branch
      %18 = sbr.rel (0) target = $region5
    $region4: #{tpu_custom_call.1} parent=1 // pred_region
      _
    $region5: #{tpu_custom_call.1} parent=1 // pred_fallthru
      _
    // Predicated region
    $region6: #{tpu_custom_call.1} parent=1 // pred_check
      _
    $region7: #{tpu_custom_call.1} parent=1 // pred_check_branch
      %20 = sbr.rel (0) target = $region9
    $region8: #{tpu_custom_call.1} parent=1 // pred_region
      %s22 = ssub.s32 512, 512
      %23 = vsyncadd [#allocation3], %s22
      %s24 = sshll.u32 [#allocation2], 4
      %s25 = int_to_ptr.vmem [resolvable:$true] %s24
      %30 = dma.hbm_to_vmem [thread:$0]  %s1, 512, %s25, [#allocation3], 64, 64, 4
    $region9: #{tpu_custom_call.1} parent=1 // pred_fallthru
      _
    // Predicated region
    $region10: #{tpu_custom_call.1} parent=1 // pred_check
      _
    $region11: #{tpu_custom_call.1} parent=1 // pred_check_branch
      %32 = sbr.rel (0) target = $region13
    $region12: #{tpu_custom_call.1} parent=1 // pred_region
      _
    $region13: #{tpu_custom_call.1} parent=1 // pred_fallthru
      _
    // Predicated region
    $region14: #{tpu_custom_call.1} parent=1 // pred_check
      _
    $region15: #{tpu_custom_call.1} parent=1 // pred_check_branch
      %34 = sbr.rel (0) target = $region17
    $region16: #{tpu_custom_call.1} parent=1 // pred_region
      %s36 = ssub.s32 2048, 2048
      %37 = vsyncadd [#allocation6], %s36
      %s38 = sshll.u32 [#allocation5], 4
      %s39 = int_to_ptr.vmem [resolvable:$true] %s38
      %44 = dma.hbm_to_vmem [thread:$0]  %s3, 2048, %s39, [#allocation6], 128, 128, 8
    $region17: #{tpu_custom_call.1} parent=1 // pred_fallthru
      _
    // Predicated region
    $region18: #{tpu_custom_call.1} parent=1 // pred_check
      _
    $region19: #{tpu_custom_call.1} parent=1 // pred_check_branch
      %46 = sbr.rel (0) target = $region21
    $region20: #{tpu_custom_call.1} parent=1 // pred_region
      _
    $region21: #{tpu_custom_call.1} parent=1 // pred_fallthru
      _
    // Predicated region
    $region22: #{tpu_custom_call.1} parent=1 // pred_check
      _
    $region23: #{tpu_custom_call.1} parent=1 // pred_check_branch
      %48 = sbr.rel (0) target = $region25
    $region24: #{tpu_custom_call.1} parent=1 // pred_region
      _
    $region25: #{tpu_custom_call.1} parent=1 // pred_fallthru
      _
    // Predicated region
    $region26: #{tpu_custom_call.1} parent=1 // pred_check
      _
    $region27: #{tpu_custom_call.1} parent=1 // pred_check_branch
      %50 = sbr.rel (0) target = $region29
    $region28: #{tpu_custom_call.1} parent=1 // pred_region
      %51 = dma.done [#allocation3], 512
    $region29: #{tpu_custom_call.1} parent=1 // pred_fallthru
      _
    // Predicated region
    $region30: #{tpu_custom_call.1} parent=1 // pred_check
      _
    $region31: #{tpu_custom_call.1} parent=1 // pred_check_branch
      %53 = sbr.rel (0) target = $region33
    $region32: #{tpu_custom_call.1} parent=1 // pred_region
      %54 = dma.done [#allocation6], 2048
    $region33: #{tpu_custom_call.1} parent=1 // pred_fallthru
      _
    %v56 = vld [vmem:[%s0] sm:$0x1]
    %v57 = vld [vmem:[%s0 + $0x1] sm:$0x1]
    %v58 = vld [vmem:[%s0 + $0x2] sm:$0x1]
    %v59 = vld [vmem:[%s0 + $0x3] sm:$0x1]
    %v60 = vld [vmem:[#allocation2] sm:$0xf]
    %v61 = vld [vmem:[#allocation2 + $0x4] sm:$0xf]
    %v62 = vld [vmem:[#allocation2 + $0x8] sm:$0xf]
    %v63 = vld [vmem:[#allocation2 + $0xc] sm:$0xf]
    %v64 = vld [vmem:[#allocation2 + $0x10] sm:$0xf]
    %v65 = vld [vmem:[#allocation2 + $0x14] sm:$0xf]
    %v66 = vld [vmem:[#allocation2 + $0x18] sm:$0xf]
    %v67 = vld [vmem:[#allocation2 + $0x1c] sm:$0xf]
    %v68 = vld [vmem:[%s2] sm:$0x1]
    %v70 = vlaneseq
    %v71 = vshrl.u32 %v70, 7
    %v72 = vsub.s32 0, %v71
    %v73 = vrot.slane %v68, %v72
    %v79 = vcombine.low %v56, %v57
    %v80 = vcombine.low %v58, %v59
    %v82 = vunpack.c.l.s4 1966171168
    %v83 = vunpack.c.0.s8 %v82
    %v84 = vlaneseq
    %v85 = vshrl.u32 %v84, 7
    %v86 = vsub.s32 %v83, %v85
    %v87 = vrot.slane %v79, %v86
    %v89 = vunpack.c.l.s4 1966171168
    %v90 = vunpack.c.0.s8 %v89
    %v91 = vlaneseq
    %v92 = vshrl.u32 %v91, 7
    %v93 = vsub.s32 %v90, %v92
    %v94 = vrot.slane %v80, %v93
    %v95 = vcombine.low %v87, %v94
    %v97 = vunpack.c.l.s4 1966171168
    %v98 = vunpack.c.0.s8 %v97
    %v99 = vlaneseq
    %v100 = vshrl.u32 %v99, 7
    %v101 = vsub.s32 %v98, %v100
    %v102 = vrot.slane %v95, %v101
    %v111 = vunpack.c.l.b16 %v60
    %v112 = vunpack.c.l.b16 %v61
    %v113 = vunpack.c.l.b16 %v62
    %v114 = vunpack.c.l.b16 %v63
    %v115 = vunpack.c.l.b16 %v64
    %v116 = vunpack.c.l.b16 %v65
    %v117 = vunpack.c.l.b16 %v66
    %v118 = vunpack.c.l.b16 %v67
    %v119 = vpack.c.b16 %v112, %v111
    %v120 = vpack.c.b16 %v114, %v113
    %v121 = vpack.c.b16 %v116, %v115
    %v122 = vpack.c.b16 %v118, %v117
    %vm127 = vcmask 523264
    %v129 = vsel %vm127, %v102, 0
    %131 = vmatprep.subr.bf16.mxu0 0
    %132 = vmatpush1.bf16.msra.mxu0 %v119
    %133 = vmatprep.subr.bf16.mxu0 0
    %134 = vmatpush1.bf16.msra.mxu0 %v120
    %135 = vmatprep.subr.bf16.mxu0 0
    %136 = vmatpush1.bf16.msra.mxu0 %v121
    %137 = vmatprep.subr.bf16.mxu0 0
    %138 = vmatpush1.bf16.msra.mxu0 %v122
    %139 = vmatprep.subr.bf16.mxu0 0
    %140 = vmatpush1.bf16.msra.mxu0 0
    %141 = vmatprep.subr.bf16.mxu0 0
    %142 = vmatpush1.bf16.msra.mxu0 0
    %143 = vmatprep.subr.bf16.mxu0 0
    %144 = vmatpush1.bf16.msra.mxu0 0
    %145 = vmatprep.subr.bf16.mxu0 0
    %146 = vmatpush1.bf16.msra.mxu0 0
    %147 = vmatprep.subr.bf16.mxu0 0
    %148 = vmatpush1.bf16.msra.mxu0 0
    %149 = vmatprep.subr.bf16.mxu0 0
    %150 = vmatpush1.bf16.msra.mxu0 0
    %151 = vmatprep.subr.bf16.mxu0 0
    %152 = vmatpush1.bf16.msra.mxu0 0
    %153 = vmatprep.subr.bf16.mxu0 0
    %154 = vmatpush1.bf16.msra.mxu0 0
    %155 = vmatprep.subr.bf16.mxu0 0
    %156 = vmatpush1.bf16.msra.mxu0 0
    %157 = vmatprep.subr.bf16.mxu0 0
    %158 = vmatpush1.bf16.msra.mxu0 0
    %159 = vmatprep.subr.bf16.mxu0 0
    %160 = vmatpush1.bf16.msra.mxu0 0
    %161 = vmatprep.subr.bf16.mxu0 0
    %162 = vmatpush1.bf16.msra.mxu0 0
    %163 = vmatprep.mubr.bf16.mxu0 0
    %164 = vmatmul.mubr.bf16.gmra.mrb[0].mxu0 %v129
    %v165 = vpop.f32.mrb[0].mxu0
    %v166 = vadd.f32 %v73, %v165
    %v167 = vpop.f32.mrb[0].mxu0
    %v168 = vpop.f32.mrb[0].mxu0
    %v169 = vpop.f32.mrb[0].mxu0
    %170 = vdwg.mxu0
    %v171 = vlaneseq
    %v172 = vshrl.u32 %v171, 7
    %s173 = smul.u32 0, 8
    %v174 = vstv %s173
    %v175 = vadd.s32 %v172, %v174
    %vm176 = vcmp.lt.s32.totalorder %v175, 2
    %v177 = vmul.f32 %v166, %v166
    %178 = vadd.xlane.f32.xlu0 %v177
    %v179 = vpop.xlane.xlu0 %178
    %v180 = vrsqrt.pop %v179
    %v181 = vmul.f32 %v179, %v180
    %vm182 = vcmp.eq.f32.partialorder %v179, inf
    %v183 = vsel %vm182, %v179, %v181
    %vm184 = vcmp.eq.f32.partialorder %v179, 0.0
    %v185 = vand.u32 %v179, 2147483648
    %v186 = vsel %vm184, %v185, %v183
    %v187 = vsel %vm176, %v186, 0.0
    %v188 = vrot.slane %v187, 4
    %v189 = vadd.f32 %v187, %v188
    %v190 = vrot.slane %v189, 2
    %v191 = vadd.f32 %v189, %v190
    %v192 = vrot.slane %v191, 1
    %v193 = vadd.f32 %v191, %v192
    %v194 = vpack.c.bf16 %v166, %v166
    %v195 = vld [vmem:[#allocation5] sm:$0xff]
    %v196 = vld [vmem:[#allocation5 + $0x8] sm:$0xff]
    %v197 = vld [vmem:[#allocation5 + $0x10] sm:$0xff]
    %v198 = vld [vmem:[#allocation5 + $0x18] sm:$0xff]
    %v199 = vld [vmem:[#allocation5 + $0x20] sm:$0xff]
    %v200 = vld [vmem:[#allocation5 + $0x28] sm:$0xff]
    %v201 = vld [vmem:[#allocation5 + $0x30] sm:$0xff]
    %v202 = vld [vmem:[#allocation5 + $0x38] sm:$0xff]
    %v203 = vld [vmem:[#allocation5 + $0x40] sm:$0xff]
    %v204 = vld [vmem:[#allocation5 + $0x48] sm:$0xff]
    %v205 = vld [vmem:[#allocation5 + $0x50] sm:$0xff]
    %v206 = vld [vmem:[#allocation5 + $0x58] sm:$0xff]
    %v207 = vld [vmem:[#allocation5 + $0x60] sm:$0xff]
    %v208 = vld [vmem:[#allocation5 + $0x68] sm:$0xff]
    %v209 = vld [vmem:[#allocation5 + $0x70] sm:$0xff]
    %v210 = vld [vmem:[#allocation5 + $0x78] sm:$0xff]
    %v211 = vld [vmem:[%s4] sm:$0x3]
    %v213 = vlaneseq
    %v214 = vshrl.u32 %v213, 7
    %v215 = vsub.s32 0, %v214
    %v216 = vrot.slane %v211, %v215
    %v217 = vlaneseq
    %v218 = vshrl.u32 %v217, 7
    %v219 = vsub.s32 1, %v218
    %v220 = vrot.slane %v211, %v219
    %v239 = vunpack.c.l.b16 %v195
    %v240 = vunpack.c.h.b16 %v195
    %v241 = vunpack.c.l.b16 %v196
    %v242 = vunpack.c.h.b16 %v196
    %v243 = vunpack.c.l.b16 %v197
    %v244 = vunpack.c.h.b16 %v197
    %v245 = vunpack.c.l.b16 %v198
    %v246 = vunpack.c.h.b16 %v198
    %v247 = vunpack.c.l.b16 %v199
    %v248 = vunpack.c.h.b16 %v199
    %v249 = vunpack.c.l.b16 %v200
    %v250 = vunpack.c.h.b16 %v200
    %v251 = vunpack.c.l.b16 %v201
    %v252 = vunpack.c.h.b16 %v201
    %v253 = vunpack.c.l.b16 %v202
    %v254 = vunpack.c.h.b16 %v202
    %v255 = vunpack.c.l.b16 %v203
    %v256 = vunpack.c.h.b16 %v203
    %v257 = vunpack.c.l.b16 %v204
    %v258 = vunpack.c.h.b16 %v204
    %v259 = vunpack.c.l.b16 %v205
    %v260 = vunpack.c.h.b16 %v205
    %v261 = vunpack.c.l.b16 %v206
    %v262 = vunpack.c.h.b16 %v206
    %v263 = vunpack.c.l.b16 %v207
    %v264 = vunpack.c.h.b16 %v207
    %v265 = vunpack.c.l.b16 %v208
    %v266 = vunpack.c.h.b16 %v208
    %v267 = vunpack.c.l.b16 %v209
    %v268 = vunpack.c.h.b16 %v209
    %v269 = vunpack.c.l.b16 %v210
    %v270 = vunpack.c.h.b16 %v210
    %v271 = vpack.c.b16 %v241, %v239
    %v272 = vpack.c.b16 %v242, %v240
    %v273 = vpack.c.b16 %v245, %v243
    %v274 = vpack.c.b16 %v246, %v244
    %v275 = vpack.c.b16 %v249, %v247
    %v276 = vpack.c.b16 %v250, %v248
    %v277 = vpack.c.b16 %v253, %v251
    %v278 = vpack.c.b16 %v254, %v252
    %v279 = vpack.c.b16 %v257, %v255
    %v280 = vpack.c.b16 %v258, %v256
    %v281 = vpack.c.b16 %v261, %v259
    %v282 = vpack.c.b16 %v262, %v260
    %v283 = vpack.c.b16 %v265, %v263
    %v284 = vpack.c.b16 %v266, %v264
    %v285 = vpack.c.b16 %v269, %v267
    %v286 = vpack.c.b16 %v270, %v268
    %303 = vmatprep.subr.bf16.mxu0 %v272
    %304 = vmatpush1.bf16.msra.mxu0 %v271
    %305 = vmatprep.subr.bf16.mxu0 %v274
    %306 = vmatpush1.bf16.msra.mxu0 %v273
    %307 = vmatprep.subr.bf16.mxu0 %v276
    %308 = vmatpush1.bf16.msra.mxu0 %v275
    %309 = vmatprep.subr.bf16.mxu0 %v278
    %310 = vmatpush1.bf16.msra.mxu0 %v277
    %311 = vmatprep.subr.bf16.mxu0 %v280
    %312 = vmatpush1.bf16.msra.mxu0 %v279
    %313 = vmatprep.subr.bf16.mxu0 %v282
    %314 = vmatpush1.bf16.msra.mxu0 %v281
    %315 = vmatprep.subr.bf16.mxu0 %v284
    %316 = vmatpush1.bf16.msra.mxu0 %v283
    %317 = vmatprep.subr.bf16.mxu0 %v286
    %318 = vmatpush1.bf16.msra.mxu0 %v285
    %319 = vmatprep.subr.bf16.mxu0 0
    %320 = vmatpush1.bf16.msra.mxu0 0
    %321 = vmatprep.subr.bf16.mxu0 0
    %322 = vmatpush1.bf16.msra.mxu0 0
    %323 = vmatprep.subr.bf16.mxu0 0
    %324 = vmatpush1.bf16.msra.mxu0 0
    %325 = vmatprep.subr.bf16.mxu0 0
    %326 = vmatpush1.bf16.msra.mxu0 0
    %327 = vmatprep.subr.bf16.mxu0 0
    %328 = vmatpush1.bf16.msra.mxu0 0
    %329 = vmatprep.subr.bf16.mxu0 0
    %330 = vmatpush1.bf16.msra.mxu0 0
    %331 = vmatprep.subr.bf16.mxu0 0
    %332 = vmatpush1.bf16.msra.mxu0 0
    %333 = vmatprep.subr.bf16.mxu0 0
    %334 = vmatpush1.bf16.msra.mxu0 0
    %335 = vmatprep.mubr.bf16.mxu0 0
    %336 = vmatmul.mubr.bf16.gmra.mrb[0].mxu0 %v194
    %v337 = vpop.f32.mrb[0].mxu0
    %v338 = vadd.f32 %v216, %v337
    %v339 = vpop.f32.mrb[0].mxu0
    %v340 = vadd.f32 %v220, %v339
    %v341 = vpop.f32.mrb[0].mxu0
    %v342 = vpop.f32.mrb[0].mxu0
    %343 = vdwg.mxu0
    %344 = vst [vmem:[#allocation7] sm:$0xff] %v338
    %v345 = vsub.f32 %v340, %v179
    %346 = vmax.xlane.f32.xlu0 %v345
    %v347 = vpop.xlane.xlu0 %346
    %v348 = vsub.f32 %v345, %v347
    %v349 = vmul.f32 %v348, 1.442695
    %v350 = vpow.pop %v349
    %351 = vadd.xlane.f32.xlu0 %v350
    %v352 = vpop.xlane.xlu0 %351
    %v353 = vlog2.pop %v352
    %v354 = vmul.f32 %v353, 0.6931472
    %v355 = vadd.f32 %v347, %v354
    %v356 = vlaneseq
    %v357 = vand.u32 %v356, 127
    %v358 = vld [vmem:[%s5] sm:$0xff]
    %359 = vset.pattern.permute.xlu0 0
    %360 = vperm.xlu0 %359, %v358
    %v361 = vpop.permute.xlu0 %360
    %vm362 = vcmp.eq.s32.totalorder %v357, %v361
    %v363 = vsel %vm362, %v345, 0.0
    %364 = vadd.xlane.f32.xlu0 %v363
    %v365 = vpop.xlane.xlu0 %364
    %v366 = vsub.f32 %v355, %v365
    %v367 = vsel %vm176, %v366, 0.0
    %v368 = vrot.slane %v367, 4
    %v369 = vadd.f32 %v367, %v368
    %v370 = vrot.slane %v369, 2
    %v371 = vadd.f32 %v369, %v370
    %v372 = vrot.slane %v371, 1
    %v373 = vadd.f32 %v371, %v372
    %vm374 = vcmp.eq.s32.totalorder %v357, 0
    %v375 = vsel %vm374, %v373, 0.0
    %vm376 = vcmp.eq.s32.totalorder %v357, 1
    %v377 = vsel %vm376, %v193, 0.0
    %v378 = vadd.f32 %v375, %v377
    %379 = vst [vmem:[#allocation8] sm:$0x1] %v378
    // Predicated region
    $region34: #{tpu_custom_call.1} parent=1 // pred_check
      _
    $region35: #{tpu_custom_call.1} parent=1 // pred_check_branch
      %381 = sbr.rel (0) target = $region37
    $region36: #{tpu_custom_call.1} parent=1 // pred_region
      %s383 = ssub.s32 128, 32
      %384 = vsyncadd [#allocation4], %s383
      %s385 = sshll.u32 [#allocation7], 4
      %s386 = int_to_ptr.vmem [resolvable:$true] %s385
      %391 = dma.vmem_to_hbm [thread:$0]  %s386, 32, %s6, [#allocation4], 32, 32, 2
    $region37: #{tpu_custom_call.1} parent=1 // pred_fallthru
      _
    // Predicated region
    $region38: #{tpu_custom_call.1} parent=1 // pred_check
      _
    $region39: #{tpu_custom_call.1} parent=1 // pred_check_branch
      %393 = sbr.rel (0) target = $region41
    $region40: #{tpu_custom_call.1} parent=1 // pred_region
      %s395 = ssub.s32 16, 16
      %396 = vsyncadd [#allocation9], %s395
      %s398 = sshll.u32 [#allocation8], 4
      %s399 = int_to_ptr.vmem [resolvable:$true] %s398
      %401 = dma.vmem_to_hbm [thread:$0]  %s399, 16, %s7, [#allocation9]
    $region41: #{tpu_custom_call.1} parent=1 // pred_fallthru
      _
    // Predicated region
    $region42: #{tpu_custom_call.1} parent=1 // pred_check
      _
    $region43: #{tpu_custom_call.1} parent=1 // pred_check_branch
      %403 = sbr.rel (0) target = $region45
    $region44: #{tpu_custom_call.1} parent=1 // pred_region
      %404 = dma.done [#allocation4], 128
    $region45: #{tpu_custom_call.1} parent=1 // pred_fallthru
      _
    // Predicated region
    $region46: #{tpu_custom_call.1} parent=1 // pred_check
      _
    $region47: #{tpu_custom_call.1} parent=1 // pred_check_branch
      %406 = sbr.rel (0) target = $region49
    $region48: #{tpu_custom_call.1} parent=1 // pred_region
      %407 = dma.done [#allocation9], 16
    $region49: #{tpu_custom_call.1} parent=1 // pred_fallthru
      _
    %408 = vsyncpa [#allocation3], 1
    %409 = vsyncpa [#allocation6], 1
    %410 = vsyncpa [#allocation4], 1
    %411 = vsyncpa [#allocation9], 1

</llo_original>
